<compile_context>
chip_gen: v7x
topology: tpu7x:2x2x1
jax: 0.10.0
libtpu: 0.0.40
codegen_flags: <defaults>
</compile_context>

<pallas_src>
import jax
import jax.numpy as jnp
from jax.experimental import pallas as pl
from jax.experimental.pallas import tpu as pltpu


_LANE_WIDTH = 4096                       # lane-dense last dim (multiple of 128)
_TARGET_TILE_BYTES = 2 * 1024 * 1024     # ~2 MiB per input tile (v7x-safe)


def _round_up(x: int, m: int) -> int:
    return ((x + m - 1) // m) * m


def _checksum_kernel(x_ref, o_ref):
    # Read-only reduction: one partial sum per grid step.  The input tile is
    # never written back to HBM (unlike the previous identity-copy kernel);
    # the only write is a tiny 4 KiB lane-dense output block.
    s = jnp.sum(x_ref[...].astype(jnp.float32))
    o_ref[...] = jnp.full(o_ref.shape, s, dtype=jnp.float32)


def _pick_layout(n_elems: int, itemsize: int):
    """Choose (lane_width, tile_rows) from the flattened element count."""
    if n_elems >= _LANE_WIDTH:
        lane = _LANE_WIDTH
    else:
        # Tiny inputs: a single lane-dense row (still a multiple of 128 lanes).
        lane = max(128, _round_up(n_elems, 128))
    rows = pl.cdiv(n_elems, lane)

    # Row tile sized by bytes, rounded to a multiple of 8 sublanes.
    tile_rows = max(8, (_TARGET_TILE_BYTES // (lane * itemsize)) // 8 * 8)
    # Keep at least 2 grid steps when there is enough data so v7x's two
    # TensorCores both get work on this mem-bound pass.
    if rows > 8:
        tile_rows = min(tile_rows, _round_up(pl.cdiv(rows, 2), 8))
    tile_rows = min(tile_rows, _round_up(rows, 8))
    return lane, tile_rows


@jax.jit
def _debug_checksum(attn_weights):
    """Debug-only: stream attn_weights through a read-only Pallas reduction."""
    n = attn_weights.size
    itemsize = attn_weights.dtype.itemsize
    lane, tile_rows = _pick_layout(n, itemsize)

    # Zero-pad so every grid step reads a fully valid tile (no masked / garbage
    # last block); zeros do not affect the checksum.  Debug path only — the
    # production path below launches no kernel at all.
    rows = pl.cdiv(n, lane)
    rows_padded = _round_up(max(rows, tile_rows), tile_rows)
    n_padded = rows_padded * lane
    flat = attn_weights.reshape(-1)
    if n_padded != n:
        flat = jnp.pad(flat, (0, n_padded - n))
    x2d = flat.reshape(rows_padded, lane)

    num_tiles = rows_padded // tile_rows
    tile_bytes = tile_rows * lane * itemsize

    partials = pl.pallas_call(
        _checksum_kernel,
        out_shape=jax.ShapeDtypeStruct((num_tiles, 8, 128), jnp.float32),
        grid_spec=pltpu.PrefetchScalarGridSpec(
            num_scalar_prefetch=0,
            grid=(num_tiles,),
            in_specs=[pl.BlockSpec((tile_rows, lane), lambda i: (i, 0))],
            out_specs=pl.BlockSpec((1, 8, 128), lambda i: (i, 0, 0)),
        ),
        compiler_params=pltpu.CompilerParams(
            dimension_semantics=("parallel",),
            # Derived limit: double-buffered input tiles + tiny output blocks
            # + headroom.  Stays far below v7x's 64 MiB physical VMEM per TC
            # and under the 32 MiB scoped default on all generations.
            vmem_limit_bytes=4 * tile_bytes + (4 << 20),
        ),
    )(x2d)
    return jnp.sum(partials[:, 0, 0])


def none_importance_forward(attn_weights, *, _debug_touch_tpu=False, **kwargs):
    """Faithful port of NoneImportance.forward: ignores the input, returns None.

    Production path launches no kernel (the module has no compute).  Set
    `_debug_touch_tpu=True` to run attn_weights through the read-only Pallas
    checksum kernel purely for TPU-path validation; its result is discarded.
    """
    # TODO(synk): the module has no compute; the optional checksum kernel exists
    # only so there is *some* Pallas code to validate — the result is dropped.
    if _debug_touch_tpu:
        jax.block_until_ready(_debug_checksum(attn_weights))
    return None


if __name__ == "__main__":
    key = jax.random.PRNGKey(0)
    # Small attention-weight-like tensor: (batch=2, heads=4, q_len=8, k_len=128)
    attn_weights = jax.random.uniform(key, (2, 4, 8, 128), dtype=jnp.float32)

    # Exercise the Pallas debug path once and validate the checksum.
    got = jax.block_until_ready(_debug_checksum(attn_weights))
    want = jnp.sum(attn_weights.astype(jnp.float32))
    assert jnp.allclose(got, want, rtol=1e-4, atol=1e-3), (got, want)

    # Semantics check: the module's forward must return None (no kernel launch).
    out = none_importance_forward(attn_weights)
    assert out is None, f"expected None, got {type(out)}"

    print("KERNEL_OK")
</pallas_src>

<mosaic_0001>
module attributes {stable_mosaic.version = 11 : i64} {
  func.func @_checksum_kernel(%arg0: i32, %arg1: memref<8x4096xf32, #tpu.memory_space<vmem>>, %arg2: memref<1x8x128xf32, #tpu.memory_space<vmem>>) attributes {dimension_semantics = [#tpu.dimension_semantics<parallel>], iteration_bounds = array<i64: 1>, scalar_prefetch = 0 : i64, scratch_operands = 0 : i64, tpu.core_type = #tpu.core_type<tc>, window_params = [{transform_indices = @transform_0, window_bounds = array<i64: 8, 4096>}, {transform_indices = @transform_1, window_bounds = array<i64: 1, 8, 128>}]} {
    %c0 = arith.constant 0 : index
    %c0_0 = arith.constant 0 : index
    %0 = vector.load %arg1[%c0, %c0_0] : memref<8x4096xf32, #tpu.memory_space<vmem>>, vector<8x4096xf32>
    %1 = vector.shape_cast %0 : vector<8x4096xf32> to vector<1x8x4096xf32>
    %cst = arith.constant dense<0.000000e+00> : vector<1xf32>
    %2 = vector.multi_reduction <add>, %1, %cst [1, 2] : vector<1x8x4096xf32> to vector<1xf32>
    %3 = vector.shape_cast %2 : vector<1xf32> to vector<1x1x1xf32>
    %4 = vector.extract %3[0, 0, 0] : f32 from vector<1x1x1xf32>
    %5 = vector.broadcast %4 : f32 to vector<1x8x128xf32>
    %c0_1 = arith.constant 0 : index
    %c0_2 = arith.constant 0 : index
    %c0_3 = arith.constant 0 : index
    %6 = vector.load %arg2[%c0_1, %c0_2, %c0_3] : memref<1x8x128xf32, #tpu.memory_space<vmem>>, vector<1x8x128xf32>
    tpu.vector_store %arg2[%c0_1, %c0_2, %c0_3], %5 {strides = array<i32>} : memref<1x8x128xf32, #tpu.memory_space<vmem>>, vector<1x8x128xf32>,
    return
  }
  func.func @transform_0(%arg0: i32) -> (i32, i32) {
    %c0_i32 = arith.constant 0 : i32
    %c0_i32_0 = arith.constant 0 : i32
    return %arg0, %c0_i32 : i32, i32
  }
  func.func @transform_1(%arg0: i32) -> (i32, i32, i32) {
    %c0_i32 = arith.constant 0 : i32
    %c0_i32_0 = arith.constant 0 : i32
    %c0_i32_1 = arith.constant 0 : i32
    return %arg0, %c0_i32, %c0_i32_0 : i32, i32, i32
  }
}

</mosaic_0001>

<llo_original>
// kernel: _debug_checksum.1
$region0: #{_debug_checksum.1}
  #allocation0 [shape = 'u32[]', space=smem, size = 0x4, offset = 0x4, fixed_abs, tag = 'smem constant byte address 0x4 - core index']
  #allocation1 [shape = 'u32[144,128]{1,0:T(1,128)}', space=vmem, size = 0x12000, scoped, tag = 'internal scratch']
  %s0 = inlined_call_operand.vmem [shape: f32[8,4096], index: 0, kind: input, shape index: {}]
  %s1 = inlined_call_operand.vmem [shape: f32[1,8,128], index: 1, kind: output, shape index: {}]
  %s2 = sld [smem:[#allocation0]]
  $region14: #{_debug_checksum.1} parent=0
    _
  %s4 = ssub.s32 1, %s2
  %s5 = scalar_select 0, %s4, %s2
  // Predicated region
  $region2: #{_debug_checksum.1} parent=0 // pred_check
    _
  $region3: #{_debug_checksum.1} parent=0 // pred_check_branch
    %7 = sbr.rel (0) target = $region5
  $region4: #{_debug_checksum.1} parent=0 // pred_region
    _
  $region5: #{_debug_checksum.1} parent=0 // pred_fallthru
    _
  %v8 = vld [vmem:[%s0] sm:$0xff]
  %v9 = vld [vmem:[%s0 + $0x8] sm:$0xff]
  %v10 = vld [vmem:[%s0 + $0x10] sm:$0xff]
  %v11 = vld [vmem:[%s0 + $0x18] sm:$0xff]
  %v12 = vld [vmem:[%s0 + $0x20] sm:$0xff]
  %v13 = vld [vmem:[%s0 + $0x28] sm:$0xff]
  %v14 = vld [vmem:[%s0 + $0x30] sm:$0xff]
  %v15 = vld [vmem:[%s0 + $0x38] sm:$0xff]
  %v16 = vld [vmem:[%s0 + $0x40] sm:$0xff]
  %v17 = vld [vmem:[%s0 + $0x48] sm:$0xff]
  %v18 = vld [vmem:[%s0 + $0x50] sm:$0xff]
  %v19 = vld [vmem:[%s0 + $0x58] sm:$0xff]
  %v20 = vld [vmem:[%s0 + $0x60] sm:$0xff]
  %v21 = vld [vmem:[%s0 + $0x68] sm:$0xff]
  %v22 = vld [vmem:[%s0 + $0x70] sm:$0xff]
  %v23 = vld [vmem:[%s0 + $0x78] sm:$0xff]
  %v24 = vld [vmem:[%s0 + $0x80] sm:$0xff]
  %v25 = vld [vmem:[%s0 + $0x88] sm:$0xff]
  %v26 = vld [vmem:[%s0 + $0x90] sm:$0xff]
  %v27 = vld [vmem:[%s0 + $0x98] sm:$0xff]
  %v28 = vld [vmem:[%s0 + $0xa0] sm:$0xff]
  %v29 = vld [vmem:[%s0 + $0xa8] sm:$0xff]
  %v30 = vld [vmem:[%s0 + $0xb0] sm:$0xff]
  %v31 = vld [vmem:[%s0 + $0xb8] sm:$0xff]
  %v32 = vld [vmem:[%s0 + $0xc0] sm:$0xff]
  %v33 = vld [vmem:[%s0 + $0xc8] sm:$0xff]
  %v34 = vld [vmem:[%s0 + $0xd0] sm:$0xff]
  %v35 = vld [vmem:[%s0 + $0xd8] sm:$0xff]
  %v36 = vld [vmem:[%s0 + $0xe0] sm:$0xff]
  %v37 = vld [vmem:[%s0 + $0xe8] sm:$0xff]
  %v38 = vld [vmem:[%s0 + $0xf0] sm:$0xff]
  %v39 = vld [vmem:[%s0 + $0xf8] sm:$0xff]
  %v40 = vadd.f32 %v8, %v9
  %v41 = vadd.f32 %v40, %v10
  %v42 = vadd.f32 %v41, %v11
  %v43 = vadd.f32 %v42, %v12
  %v44 = vadd.f32 %v43, %v13
  %v45 = vadd.f32 %v44, %v14
  %v46 = vadd.f32 %v45, %v15
  %v47 = vadd.f32 %v46, %v16
  %v48 = vadd.f32 %v47, %v17
  %v49 = vadd.f32 %v48, %v18
  %v50 = vadd.f32 %v49, %v19
  %v51 = vadd.f32 %v50, %v20
  %v52 = vadd.f32 %v51, %v21
  %v53 = vadd.f32 %v52, %v22
  %v54 = vadd.f32 %v53, %v23
  %v55 = vadd.f32 %v54, %v24
  %v56 = vadd.f32 %v55, %v25
  %v57 = vadd.f32 %v56, %v26
  %v58 = vadd.f32 %v57, %v27
  %v59 = vadd.f32 %v58, %v28
  %v60 = vadd.f32 %v59, %v29
  %v61 = vadd.f32 %v60, %v30
  %v62 = vadd.f32 %v61, %v31
  %v63 = vadd.f32 %v62, %v32
  %v64 = vadd.f32 %v63, %v33
  %v65 = vadd.f32 %v64, %v34
  %v66 = vadd.f32 %v65, %v35
  %v67 = vadd.f32 %v66, %v36
  %v68 = vadd.f32 %v67, %v37
  %v69 = vadd.f32 %v68, %v38
  %v70 = vadd.f32 %v69, %v39
  %71 = vadd.xlane.f32.xlu0 %v70
  %v72 = vpop.xlane.xlu0 %71
  %v73 = vrot.slane %v72, 4
  %v74 = vadd.f32 %v72, %v73
  %v75 = vrot.slane %v74, 2
  %v76 = vadd.f32 %v74, %v75
  %v77 = vrot.slane %v76, 1
  %v78 = vadd.f32 %v76, %v77
  %s79 = vtos %v78
  %v80 = vstv %s79
  %81 = vst [vmem:[%s1] sm:$0xff] %v80
  // Predicated region
  $region6: #{_debug_checksum.1} parent=0 // pred_check
    _
  $region7: #{_debug_checksum.1} parent=0 // pred_check_branch
    %83 = sbr.rel (0) target = $region9
  $region8: #{_debug_checksum.1} parent=0 // pred_region
    _
  $region9: #{_debug_checksum.1} parent=0 // pred_fallthru
    _
  // Predicated region
  $region10: #{_debug_checksum.1} parent=0 // pred_check
    _
  $region11: #{_debug_checksum.1} parent=0 // pred_check_branch
    %85 = sbr.rel (0) target = $region13
  $region12: #{_debug_checksum.1} parent=0 // pred_region
    _
  $region13: #{_debug_checksum.1} parent=0 // pred_fallthru
    _

</llo_original>
